<compile_context>
chip_gen: v7x
topology: tpu7x:2x2x1
jax: 0.10.0
libtpu: 0.0.40
codegen_flags: <defaults>
</compile_context>

<pallas_src>
import numpy as np
import jax
import jax.numpy as jnp
from jax.experimental import pallas as pl
from jax.experimental.pallas import tpu as pltpu


def prelu_kernel(x_ref, w_ref, o_ref):
    """x_ref: (1, C, THW)   w_ref: (C, 1)   o_ref: (1, C, THW)."""
    x = x_ref[...]
    w = w_ref[...][None]                 # (1, C, 1): sublane-aligned broadcast over lanes
    o_ref[...] = jnp.where(x >= 0, x, w * x).astype(o_ref.dtype)


def _choose_hw_tile(hw, c, itemsize, max_block_bytes=4 << 20):
    """Largest lane tile that is either the full dim or a multiple of 128 dividing hw,
    keeping one (C, tile) block under max_block_bytes."""
    if c * hw * itemsize <= max_block_bytes or hw % 128 != 0:
        return hw
    budget = max(128, (max_block_bytes // (c * itemsize)) // 128 * 128)
    tile = budget
    while tile > 128 and hw % tile != 0:
        tile -= 128
    return tile if hw % tile == 0 else hw


def meta_prelu_forward(x, weight):
    """x: (B, C, *spatial) float array (NCHW-style). weight: (1,) or (C,) slope."""
    orig_shape = x.shape
    B, C = x.shape[0], x.shape[1]
    hw = int(np.prod(x.shape[2:])) if x.ndim > 2 else 1

    x3 = x.reshape(B, C, hw)                         # free (row-major) reshape, no transpose
    w = jnp.asarray(weight, x.dtype).reshape(-1)
    if w.shape[0] == 1:                              # num_filters=None -> shared scalar slope
        w = jnp.broadcast_to(w, (C,))
    assert w.shape[0] == C, "PReLU weight must be a scalar or have C entries"
    w2 = w.reshape(C, 1)

    itemsize = jnp.dtype(x.dtype).itemsize
    thw = _choose_hw_tile(hw, C, itemsize)
    grid = (B, hw // thw)

    block_bytes = C * thw * itemsize                 # one x block == one out block
    vmem_limit = int(min(128 << 20, max(32 << 20, 8 * block_bytes)))

    out3 = pl.pallas_call(
        prelu_kernel,
        out_shape=jax.ShapeDtypeStruct((B, C, hw), x.dtype),
        grid_spec=pltpu.PrefetchScalarGridSpec(
            num_scalar_prefetch=0,
            grid=grid,
            in_specs=[
                pl.BlockSpec((1, C, thw), lambda b, t: (b, 0, t)),
                pl.BlockSpec((C, 1), lambda b, t: (0, 0)),
            ],
            out_specs=pl.BlockSpec((1, C, thw), lambda b, t: (b, 0, t)),
        ),
        compiler_params=pltpu.CompilerParams(
            dimension_semantics=("parallel", "parallel"),
            vmem_limit_bytes=vmem_limit,
        ),
    )(x3, w2)
    return out3.reshape(orig_shape)


def reference_prelu(x, weight):
    """Pure-JAX reference matching torch.nn.functional.prelu."""
    C = x.shape[1]
    w = jnp.asarray(weight, x.dtype).reshape(-1)
    if w.shape[0] == 1:
        w = jnp.broadcast_to(w, (C,))
    wb = w.reshape((1, C) + (1,) * (x.ndim - 2))
    return jnp.maximum(x, 0) + wb * jnp.minimum(x, 0)


if __name__ == "__main__":
    B, C, H, W = 2, 4, 16, 16
    key = jax.random.PRNGKey(0)
    kx, kw = jax.random.split(key)
    x = jax.random.normal(kx, (B, C, H, W), jnp.float32)

    # Case 1: default module init with num_filters=C (per-channel slope = 0.25).
    w_default = jnp.ones((C,), jnp.float32) * 0.25
    # Case 2: externally supplied params (MAML-style inner-loop weights).
    w_ext = jax.random.normal(kw, (C,), jnp.float32) * 0.1 + 0.25
    # Case 3: num_filters=None -> single shared scalar slope.
    w_scalar = jnp.asarray([0.25], jnp.float32)

    fwd = jax.jit(meta_prelu_forward)
    for w in (w_default, w_ext, w_scalar):
        out = jax.block_until_ready(fwd(x, w))
        ref = jax.block_until_ready(reference_prelu(x, w))
        np.testing.assert_allclose(np.asarray(out), np.asarray(ref),
                                   rtol=1e-6, atol=1e-6)

    print("KERNEL_OK")
</pallas_src>

<mosaic_0001>
module attributes {stable_mosaic.version = 11 : i64} {
  func.func @prelu_kernel(%arg0: i32, %arg1: i32, %arg2: memref<1x4x256xf32, #tpu.memory_space<vmem>>, %arg3: memref<4x1xf32, #tpu.memory_space<vmem>>, %arg4: memref<1x4x256xf32, #tpu.memory_space<vmem>>) attributes {dimension_semantics = [#tpu.dimension_semantics<parallel>, #tpu.dimension_semantics<parallel>], iteration_bounds = array<i64: 2, 1>, scalar_prefetch = 0 : i64, scratch_operands = 0 : i64, tpu.core_type = #tpu.core_type<tc>, window_params = [{transform_indices = @transform_0, window_bounds = array<i64: 1, 4, 256>}, {pipeline_mode = #tpu.pipeline_mode<synchronous>, transform_indices = @transform_1, window_bounds = array<i64: 4, 1>}, {transform_indices = @transform_2, window_bounds = array<i64: 1, 4, 256>}]} {
    %c0 = arith.constant 0 : index
    %c0_0 = arith.constant 0 : index
    %c0_1 = arith.constant 0 : index
    %0 = vector.load %arg2[%c0, %c0_0, %c0_1] : memref<1x4x256xf32, #tpu.memory_space<vmem>>, vector<1x4x256xf32>
    %c0_2 = arith.constant 0 : index
    %c0_3 = arith.constant 0 : index
    %1 = vector.load %arg3[%c0_2, %c0_3] : memref<4x1xf32, #tpu.memory_space<vmem>>, vector<4x1xf32>
    %2 = vector.shape_cast %1 : vector<4x1xf32> to vector<1x4x1xf32>
    %cst = arith.constant 0.000000e+00 : f32
    %3 = vector.broadcast %cst : f32 to vector<1x4x256xf32>
    %4 = arith.cmpf oge, %0, %3 : vector<1x4x256xf32>
    %5 = vector.broadcast %2 : vector<1x4x1xf32> to vector<1x4x256xf32>
    %6 = arith.mulf %5, %0 : vector<1x4x256xf32>
    %7 = arith.select %4, %0, %6 : vector<1x4x256xi1>, vector<1x4x256xf32>
    %c0_4 = arith.constant 0 : index
    %c0_5 = arith.constant 0 : index
    %c0_6 = arith.constant 0 : index
    %8 = vector.load %arg4[%c0_4, %c0_5, %c0_6] : memref<1x4x256xf32, #tpu.memory_space<vmem>>, vector<1x4x256xf32>
    tpu.vector_store %arg4[%c0_4, %c0_5, %c0_6], %7 {strides = array<i32>} : memref<1x4x256xf32, #tpu.memory_space<vmem>>, vector<1x4x256xf32>,
    return
  }
  func.func @transform_0(%arg0: i32, %arg1: i32) -> (i32, i32, i32) {
    %c0_i32 = arith.constant 0 : i32
    %c0_i32_0 = arith.constant 0 : i32
    return %arg0, %c0_i32, %arg1 : i32, i32, i32
  }
  func.func @transform_1(%arg0: i32, %arg1: i32) -> (i32, i32) {
    %c0_i32 = arith.constant 0 : i32
    %c0_i32_0 = arith.constant 0 : i32
    %c0_i32_1 = arith.constant 0 : i32
    return %c0_i32, %c0_i32_0 : i32, i32
  }
  func.func @transform_2(%arg0: i32, %arg1: i32) -> (i32, i32, i32) {
    %c0_i32 = arith.constant 0 : i32
    %c0_i32_0 = arith.constant 0 : i32
    return %arg0, %c0_i32, %arg1 : i32, i32, i32
  }
}

</mosaic_0001>

<llo_original>
// kernel: meta_prelu_forward.1
$region0: #{meta_prelu_forward.1}
  #allocation0 [shape = 'u32[]', space=smem, size = 0x4, offset = 0x4, fixed_abs, tag = 'smem constant byte address 0x4 - core index']
  #allocation1 [shape = 'u32[144,128]{1,0:T(1,128)}', space=vmem, size = 0x12000, scoped, tag = 'internal scratch']
  %s0 = inlined_call_operand.vmem [shape: f32[2,4,256], index: 0, kind: input, shape index: {}]
  %s1 = inlined_call_operand.vmem [shape: f32[4,1], index: 1, kind: input, shape index: {}]
  %s2 = inlined_call_operand.vmem [shape: f32[2,4,256], index: 2, kind: output, shape index: {}]
  %s3 = sld [smem:[#allocation0]]
  $region41: #{meta_prelu_forward.1} parent=0
    _
  %s5 = ssub.s32 1, %s3
  %s6 = scalar_select 0, %s5, %s3
  loop: start=0, step=1, limit=4
  $region2: #{meta_prelu_forward.1} parent=0 // loop_pre_header
    _
  $region3: #{meta_prelu_forward.1} parent=0 // loop_header
    %s8 = sphi 0, %s12
    %p9 = scmp.ge.s32.totalorder %s8, 4
    %s15 = sphi 0, %s27
    %s16 = sphi 0, %s23
    %s17 = sphi 0, %s15
    %s18 = sphi 0, %s16
    %s19 = sphi 0, %s17
    %s20 = sphi 0, %s18
    %s32 = sphi 0, %s34
    %s35 = sphi 0, %s32
    %s36 = sphi 0, %s35
    %s52 = sphi 0, %s36
    %s56 = sphi 0, %s56
    %s58 = sphi 0, %s56
    %s59 = sphi 0, %s58
    %s73 = sphi 0, %s59
    %s81 = sphi 0, %s83
    %s84 = sphi 0, %s81
    %s85 = sphi 0, %s84
    %s101 = sphi 0, %s85
  $region4: #{meta_prelu_forward.1} parent=0 // loop_header_branch
    %11 = sbr.rel (%p9) target = $region8
  $region5: #{meta_prelu_forward.1} parent=0 // loop_body
    %s13 = ssub.s32 %s8, 1
    %s14 = ssub.s32 %s8, 2
    %s21 = sadd.s32 1, %s16
    %p22 = scmp.ge.s32.totalorder %s21, 1
    %s23 = scalar_select %p22, 0, %s21
    %s24 = sadd.s32 1, %s15
    %s25 = scalar_select %p22, %s24, %s15
    %p26 = scmp.ge.s32.totalorder %s25, 2
    %s27 = scalar_select %p26, 0, %s25
    %s28 = ssub.s32 %s15, %s27
    %s29 = ssub.s32 %s16, %s23
    %s30 = sor.u32 %s28, %s29
    %p31 = scmp.eq.s32.totalorder %s30, 0
    %s33 = sadd.s32 %s32, 1
    %s34 = scalar_select %p31, %s32, %s33
    %p37 = pneg %p31
    %p38 = scmp.eq.s32.totalorder %s8, 1
    %p39 = por %p37, %p38
    %p40 = scmp.ne.s32.totalorder %s32, %s35
    %p41 = scmp.eq.s32.totalorder %s8, 0
    %p42 = por %p40, %p41
    %p43 = scmp.ne.s32.totalorder %s32, %s35
    %p44 = scmp.eq.s32.totalorder %s13, 1
    %p45 = por %p43, %p44
    %p46 = scmp.ne.s32.totalorder %s35, %s36
    %p47 = scmp.eq.s32.totalorder %s13, 0
    %p48 = por %p46, %p47
    %p49 = scmp.ne.s32.totalorder %s35, %s36
    %p50 = scmp.eq.s32.totalorder %s14, 1
    %p51 = por %p49, %p50
    %p53 = scmp.ne.s32.totalorder %s36, %s52
    %p54 = scmp.eq.s32.totalorder %s14, 0
    %p55 = por %p53, %p54
    %s57 = sadd.s32 %s56, 1
    %p60 = scmp.eq.s32.totalorder %s8, 1
    %p61 = scmp.ne.s32.totalorder %s56, %s58
    %p62 = scmp.eq.s32.totalorder %s8, 0
    %p63 = por %p61, %p62
    %p64 = scmp.ne.s32.totalorder %s56, %s58
    %p65 = scmp.eq.s32.totalorder %s13, 1
    %p66 = por %p64, %p65
    %p67 = scmp.ne.s32.totalorder %s58, %s59
    %p68 = scmp.eq.s32.totalorder %s13, 0
    %p69 = por %p67, %p68
    %p70 = scmp.ne.s32.totalorder %s58, %s59
    %p71 = scmp.eq.s32.totalorder %s14, 1
    %p72 = por %p70, %p71
    %p74 = scmp.ne.s32.totalorder %s59, %s73
    %p75 = scmp.eq.s32.totalorder %s14, 0
    %p76 = por %p74, %p75
    %s77 = ssub.s32 %s15, %s27
    %s78 = ssub.s32 %s16, %s23
    %s79 = sor.u32 %s77, %s78
    %p80 = scmp.eq.s32.totalorder %s79, 0
    %s82 = sadd.s32 %s81, 1
    %s83 = scalar_select %p80, %s81, %s82
    %p86 = pneg %p80
    %p87 = scmp.eq.s32.totalorder %s8, 1
    %p88 = por %p86, %p87
    %p89 = scmp.ne.s32.totalorder %s81, %s84
    %p90 = scmp.eq.s32.totalorder %s8, 0
    %p91 = por %p89, %p90
    %p92 = scmp.ne.s32.totalorder %s81, %s84
    %p93 = scmp.eq.s32.totalorder %s13, 1
    %p94 = por %p92, %p93
    %p95 = scmp.ne.s32.totalorder %s84, %s85
    %p96 = scmp.eq.s32.totalorder %s13, 0
    %p97 = por %p95, %p96
    %p98 = scmp.ne.s32.totalorder %s84, %s85
    %p99 = scmp.eq.s32.totalorder %s14, 1
    %p100 = por %p98, %p99
    %p102 = scmp.ne.s32.totalorder %s85, %s101
    %p103 = scmp.eq.s32.totalorder %s14, 0
    %p104 = por %p102, %p103
    %p105 = scmp.le.s32.totalorder 1, %s8
    %p106 = scmp.lt.s32.totalorder %s8, 3
    %p107 = pnand %p105, %p106
    %p108 = pneg %p107
    // Predicated region
    $region9: #{meta_prelu_forward.1} parent=5 // pred_check
      _
    $region10: #{meta_prelu_forward.1} parent=5 // pred_check_branch
      %110 = sbr.rel (%p107) target = $region12
    $region11: #{meta_prelu_forward.1} parent=5 // pred_region
      %s111 = ssub.s32 %s8, 1
      // Predicated region
      $region13: #{meta_prelu_forward.1} parent=11 // pred_check
        %p112 = pneg %p69
      $region14: #{meta_prelu_forward.1} parent=11 // pred_check_branch
        %114 = sbr.rel (%p112) target = $region16
      $region15: #{meta_prelu_forward.1} parent=11 // pred_region
        _
      $region16: #{meta_prelu_forward.1} parent=11 // pred_fallthru
        _
    $region12: #{meta_prelu_forward.1} parent=5 // pred_fallthru
      _
    %p115 = scmp.lt.s32.totalorder %s8, 2
    // Predicated region
    $region17: #{meta_prelu_forward.1} parent=5 // pred_check
      %p116 = pneg %p115
    $region18: #{meta_prelu_forward.1} parent=5 // pred_check_branch
      %118 = sbr.rel (%p116) target = $region20
    $region19: #{meta_prelu_forward.1} parent=5 // pred_region
      // Predicated region
      $region21: #{meta_prelu_forward.1} parent=19 // pred_check
        %p119 = pneg %p42
      $region22: #{meta_prelu_forward.1} parent=19 // pred_check_branch
        %121 = sbr.rel (%p119) target = $region24
      $region23: #{meta_prelu_forward.1} parent=19 // pred_region
        %s122 = smul.u32 2, %s16
        %p123 = scmp.lt.s32.totalorder %s15, 1
        %s124 = scalar_select %p123, %s15, 1
        %p125 = scmp.lt.s32.totalorder %s122, 1
        %s126 = scalar_select %p125, %s122, 1
        %s127 = smul.addr %s124, 2
        %s128 = sadd.s32 %s126, %s127
        %s129 = smul.addr %s128, 4
        %s130 = scalar_lea.vmem %s0, %s129
        %s131 = smul.u32 2, %s16
      $region24: #{meta_prelu_forward.1} parent=19 // pred_fallthru
        _
    $region20: #{meta_prelu_forward.1} parent=5 // pred_fallthru
      _
    %p132 = scmp.le.s32.totalorder 1, %s8
    %p133 = scmp.lt.s32.totalorder %s8, 3
    %p134 = pnand %p132, %p133
    %p135 = pneg %p134
    // Predicated region
    $region25: #{meta_prelu_forward.1} parent=5 // pred_check
      _
    $region26: #{meta_prelu_forward.1} parent=5 // pred_check_branch
      %137 = sbr.rel (%p134) target = $region28
    $region27: #{meta_prelu_forward.1} parent=5 // pred_region
      %s138 = ssub.s32 %s8, 1
      %s139 = smul.u32 2, %s18
      %p140 = scmp.lt.s32.totalorder %s17, 1
      %s141 = scalar_select %p140, %s17, 1
      %p142 = scmp.lt.s32.totalorder %s139, 1
      %s143 = scalar_select %p142, %s139, 1
      %s144 = smul.addr %s141, 2
      %s145 = sadd.s32 %s143, %s144
      %s146 = smul.addr %s145, 4
      %s147 = scalar_lea.vmem %s0, %s146
      %p148 = pneg %p48
      %p149 = pneg %p45
      %p150 = pneg %p69
      %p151 = pneg %p66
      %p152 = pneg %p97
      %p153 = pneg %p94
      %s154 = smul.u32 2, %s18
      %p155 = scmp.lt.s32.totalorder %s17, 1
      %s156 = scalar_select %p155, %s17, 1
      %p157 = scmp.lt.s32.totalorder %s154, 1
      %s158 = scalar_select %p157, %s154, 1
      %s159 = smul.addr %s156, 2
      %s160 = sadd.s32 %s158, %s159
      %s161 = smul.addr %s160, 4
      %s162 = scalar_lea.vmem %s2, %s161
      %s163 = smul.u32 2, %s18
      %p164 = scmp.lt.s32.totalorder %s17, 1
      %s165 = scalar_select %p164, %s17, 1
      %p166 = scmp.lt.s32.totalorder %s163, 1
      %s167 = scalar_select %p166, %s163, 1
      %s168 = smul.addr %s165, 2
      %s169 = sadd.s32 %s167, %s168
      %s170 = smul.addr %s169, 4
      %s171 = scalar_lea.vmem %s0, %s170
      %s172 = smul.u32 2, %s18
      %s173 = smul.u32 2, %s18
      %p174 = scmp.lt.s32.totalorder %s17, 1
      %s175 = scalar_select %p174, %s17, 1
      %p176 = scmp.lt.s32.totalorder %s173, 1
      %s177 = scalar_select %p176, %s173, 1
      %s178 = smul.addr %s175, 2
      %s179 = sadd.s32 %s177, %s178
      %s180 = smul.addr %s179, 4
      %s181 = scalar_lea.vmem %s2, %s180
      %s182 = smul.u32 2, %s18
      %v183 = vld [vmem:[%s171] sm:$0xff]
      %v184 = vld [vmem:[%s1] sm:$0xf]
      %vm185 = vcmp.ge.f32.partialorder %v183, 0.0
      %187 = vset.pattern.permute.xlu0 0
      %188 = vperm.xlu0 %187, %v184
      %v189 = vpop.permute.xlu0 %188
      %v192 = vcombine.high %v183, %v183
      %v194 = vmul.f32 %v189, %v183
      %v195 = vmul.f32 %v189, %v192
      %v198 = vcombine.low %v194, %v195
      %v200 = vsel %vm185, %v183, %v198
      %201 = vst [vmem:[%s181] sm:$0xff] %v200
      %s202 = smul.u32 2, %s18
      %p203 = scmp.lt.s32.totalorder %s17, 1
      %s204 = scalar_select %p203, %s17, 1
      %p205 = scmp.lt.s32.totalorder %s202, 1
      %s206 = scalar_select %p205, %s202, 1
      %s207 = smul.addr %s204, 2
      %s208 = sadd.s32 %s206, %s207
      %s209 = smul.addr %s208, 4
      %s210 = scalar_lea.vmem %s2, %s209
      // Predicated region
      $region29: #{meta_prelu_forward.1} parent=27 // pred_check
        %p211 = pneg %p94
      $region30: #{meta_prelu_forward.1} parent=27 // pred_check_branch
        %213 = sbr.rel (%p211) target = $region32
      $region31: #{meta_prelu_forward.1} parent=27 // pred_region
        %s214 = smul.u32 2, %s18
      $region32: #{meta_prelu_forward.1} parent=27 // pred_fallthru
        _
    $region28: #{meta_prelu_forward.1} parent=5 // pred_fallthru
      _
    %p215 = scmp.le.s32.totalorder 2, %s8
    // Predicated region
    $region33: #{meta_prelu_forward.1} parent=5 // pred_check
      %p216 = pneg %p215
    $region34: #{meta_prelu_forward.1} parent=5 // pred_check_branch
      %218 = sbr.rel (%p216) target = $region36
    $region35: #{meta_prelu_forward.1} parent=5 // pred_region
      %s219 = ssub.s32 %s8, 2
      // Predicated region
      $region37: #{meta_prelu_forward.1} parent=35 // pred_check
        %p220 = pneg %p100
      $region38: #{meta_prelu_forward.1} parent=35 // pred_check_branch
        %222 = sbr.rel (%p220) target = $region40
      $region39: #{meta_prelu_forward.1} parent=35 // pred_region
        %s223 = smul.u32 2, %s20
        %p224 = scmp.lt.s32.totalorder %s19, 1
        %s225 = scalar_select %p224, %s19, 1
        %p226 = scmp.lt.s32.totalorder %s223, 1
        %s227 = scalar_select %p226, %s223, 1
        %s228 = smul.addr %s225, 2
        %s229 = sadd.s32 %s227, %s228
        %s230 = smul.addr %s229, 4
        %s231 = scalar_lea.vmem %s2, %s230
      $region40: #{meta_prelu_forward.1} parent=35 // pred_fallthru
        _
    $region36: #{meta_prelu_forward.1} parent=5 // pred_fallthru
      _
  $region6: #{meta_prelu_forward.1} parent=0 // loop_footer
    %s12 = sadd.s32 1, %s8
  $region7: #{meta_prelu_forward.1} parent=0 // loop_footer_branch
    %7 = sbr.rel target = $region3
  $region8: #{meta_prelu_forward.1} parent=0 // loop_exit
    _

</llo_original>
